<compile_context>
chip_gen: v6e
topology: v6e:2x2x1
jax: 0.10.0
libtpu: 0.0.40
codegen_flags: <defaults>
</compile_context>

<pallas_src>
import functools

import jax
import jax.numpy as jnp
from jax.experimental import pallas as pl
from jax.experimental.pallas import tpu as pltpu


def channel_attention_kernel(x_ref, w1_ref, b1_ref, w2_ref, b2_ref,
                             attn_ref, sum_ref, max_ref,
                             *, hw_total, hw_tile, mask_last):
    # Grid = (batch_tiles, hw_tiles); HW (reduction) axis is last / innermost.
    j = pl.program_id(1)
    n_hw = pl.num_programs(1)

    @pl.when(j == 0)
    def _init():
        sum_ref[...] = jnp.zeros_like(sum_ref)
        max_ref[...] = jnp.full_like(max_ref, -jnp.inf)

    # x block: (bt, C, hw_tile) — C on sublanes, flattened spatial on lanes.
    # Keep it in the native dtype; only the (bt, C) reductions are f32.
    x = x_ref[...]
    if mask_last:
        col = jax.lax.broadcasted_iota(jnp.int32, x.shape, 2) + j * hw_tile
        valid = col < hw_total
        x_sum = jnp.where(valid, x, jnp.asarray(0, x.dtype))
        x_max = jnp.where(valid, x, jnp.asarray(-jnp.inf, x.dtype))
    else:
        x_sum = x
        x_max = x

    part_sum = jnp.sum(x_sum, axis=-1, dtype=jnp.float32)   # (bt, C) f32 acc
    part_max = jnp.max(x_max, axis=-1)                       # (bt, C) native

    sum_ref[...] = sum_ref[...] + part_sum
    max_ref[...] = jnp.maximum(max_ref[...], part_max.astype(jnp.float32))

    @pl.when(j == n_hw - 1)
    def _finalize():
        bt = attn_ref.shape[0]
        avg = sum_ref[...] * (1.0 / hw_total)                # (bt, C)
        mx = max_ref[...]                                    # (bt, C)
        # Shared bottleneck MLP applied to both pooled vectors in one pair of
        # (tiny, off-critical-path) matmuls: rows [0:bt]=avg, [bt:2bt]=max.
        pooled = jnp.concatenate([avg, mx], axis=0)          # (2*bt, C)
        w1 = w1_ref[...].astype(jnp.float32)
        b1 = b1_ref[...].astype(jnp.float32)
        w2 = w2_ref[...].astype(jnp.float32)
        b2 = b2_ref[...].astype(jnp.float32)
        h = jnp.dot(pooled, w1, preferred_element_type=jnp.float32)
        h = jnp.maximum(h + b1, 0.0)                         # ReLU
        y = jnp.dot(h, w2, preferred_element_type=jnp.float32) + b2
        sig = jax.nn.sigmoid(y[:bt] + y[bt:])                # (bt, C)
        attn_ref[...] = sig.astype(attn_ref.dtype)


def _pick_tiles(B, C, HW, itemsize, target_bytes):
    """Pick (batch_tile, hw_tile) obeying the (8,128) block rules.

    Output block is (bt, C): bt must be a multiple of 8 or equal to B.
    x block is (bt, C, hw_tile): hw_tile must be a multiple of 128 or == HW.
    Prefer >= 2 batch ("parallel") grid steps so v7x's 2 TensorCores both work.
    """
    divisors8 = [d for d in range(8, B, 8) if B % d == 0]
    fitting = [d for d in divisors8 if d * C * 128 * itemsize <= target_bytes]
    if fitting:
        bt = max(fitting)
    elif divisors8:
        bt = min(divisors8)
    else:
        bt = B  # e.g. B < 8 or prime B: full-batch block (== full dim is legal)

    if HW % 128 != 0 or bt * C * HW * itemsize <= target_bytes:
        # Whole spatial extent in one step (always legal: block dim == full dim).
        # TODO(synk): if HW is not a multiple of 128 AND too large for one tile,
        # fall back to (bt, C, h_tile, W) blocking over H instead of flat HW.
        hw_tile = HW
    else:
        hw_tile = (target_bytes // (bt * C * itemsize)) // 128 * 128
        hw_tile = int(min(max(hw_tile, 128), HW))
    return bt, hw_tile


def channel_attention(x, w1, b1, w2, b2, *, expand_spatial=True,
                      target_tile_bytes=8 << 20):
    B, C, H, W = x.shape
    HW = H * W
    M = w1.shape[1]

    # Layout plumbing only: lane-dense (B, C, H*W) view for the kernel.
    x_flat = x.reshape(B, C, HW)
    bt, hw_tile = _pick_tiles(B, C, HW, x.dtype.itemsize, target_tile_bytes)
    n_hw = pl.cdiv(HW, hw_tile)
    mask_last = (HW % hw_tile) != 0

    kernel = functools.partial(channel_attention_kernel,
                               hw_total=HW, hw_tile=hw_tile,
                               mask_last=mask_last)

    attn = pl.pallas_call(
        kernel,
        out_shape=jax.ShapeDtypeStruct((B, C), x.dtype),
        grid_spec=pltpu.PrefetchScalarGridSpec(
            num_scalar_prefetch=0,
            grid=(B // bt, n_hw),
            in_specs=[
                pl.BlockSpec((bt, C, hw_tile), lambda i, j: (i, 0, j)),
                pl.BlockSpec((C, M), lambda i, j: (0, 0)),
                pl.BlockSpec((1, M), lambda i, j: (0, 0)),
                pl.BlockSpec((M, C), lambda i, j: (0, 0)),
                pl.BlockSpec((1, C), lambda i, j: (0, 0)),
            ],
            out_specs=pl.BlockSpec((bt, C), lambda i, j: (i, 0)),
            scratch_shapes=[
                pltpu.VMEM((bt, C), jnp.float32),   # running sum
                pltpu.VMEM((bt, C), jnp.float32),   # running max
            ],
        ),
        compiler_params=pltpu.CompilerParams(
            dimension_semantics=("parallel", "arbitrary"),
            vmem_limit_bytes=48 << 20,
        ),
    )(x_flat, w1, b1, w2, b2)

    if expand_spatial:
        # Matches the PyTorch forward's (B, C, H, W) repeat.  Prefer
        # expand_spatial=False in production and let x * attn fuse the
        # broadcast instead of materializing B*C*H*W bytes in HBM.
        return jnp.broadcast_to(attn[:, :, None, None], (B, C, H, W))
    return attn[:, :, None, None]


def channel_attention_ref(x, w1, b1, w2, b2):
    """Plain-JAX reference matching the PyTorch forward."""
    B, C, H, W = x.shape
    avg = jnp.mean(x, axis=(2, 3))  # (B, C)
    mx = jnp.max(x, axis=(2, 3))    # (B, C)

    def bottleneck(p):
        h = jnp.maximum(p @ w1 + b1, 0.0)
        return h @ w2 + b2

    sig = jax.nn.sigmoid(bottleneck(avg) + bottleneck(mx))  # (B, C)
    return jnp.broadcast_to(sig[:, :, None, None], (B, C, H, W))


def _make_params(key, C, reduction_ratio):
    M = int(C / float(reduction_ratio))
    k1, k2, k3, k4 = jax.random.split(key, 4)
    bound1 = 1.0 / (C ** 0.5)
    bound2 = 1.0 / (M ** 0.5)
    w1 = jax.random.uniform(k1, (C, M), jnp.float32, -bound1, bound1)
    b1 = jax.random.uniform(k2, (1, M), jnp.float32, -bound1, bound1)
    w2 = jax.random.uniform(k3, (M, C), jnp.float32, -bound2, bound2)
    b2 = jax.random.uniform(k4, (1, C), jnp.float32, -bound2, bound2)
    return w1, b1, w2, b2


if __name__ == "__main__":
    key = jax.random.PRNGKey(0)
    kx1, kx2, kx3, kp = jax.random.split(key, 4)

    # reduction_ratio=16 requires C >= 16 for a non-empty middle layer.
    reduction_ratio = 16
    C = 32
    w1, b1, w2, b2 = _make_params(kp, C, reduction_ratio)

    # Case 1: small baseline (single grid step) — matches module defaults.
    x1 = jax.random.normal(kx1, (2, C, 16, 16), dtype=jnp.float32)
    out1 = jax.block_until_ready(channel_attention(x1, w1, b1, w2, b2))
    ref1 = channel_attention_ref(x1, w1, b1, w2, b2)
    assert out1.shape == x1.shape
    assert jnp.allclose(out1, ref1, atol=1e-5, rtol=1e-5), "case1 mismatch"

    # Case 2: forces the HW reduction grid axis (hw_tile=256 over HW=640) and
    # the partial-last-tile masking path via a tiny tile budget.
    x2 = jax.random.normal(kx2, (2, C, 20, 32), dtype=jnp.float32)
    out2 = jax.block_until_ready(
        channel_attention(x2, w1, b1, w2, b2, target_tile_bytes=64 << 10))
    ref2 = channel_attention_ref(x2, w1, b1, w2, b2)
    assert jnp.allclose(out2, ref2, atol=1e-5, rtol=1e-5), "case2 mismatch"

    # Case 3: batch tile bt=8 < B=16 (multiple-of-8 sublane rule, 2 parallel steps).
    x3 = jax.random.normal(kx3, (16, C, 16, 16), dtype=jnp.float32)
    out3 = jax.block_until_ready(channel_attention(x3, w1, b1, w2, b2))
    ref3 = channel_attention_ref(x3, w1, b1, w2, b2)
    assert jnp.allclose(out3, ref3, atol=1e-5, rtol=1e-5), "case3 mismatch"

    print("KERNEL_OK")
</pallas_src>

<mosaic_0001>
module attributes {stable_mosaic.version = 11 : i64} {
  func.func @channel_attention_kernel(%arg0: i32, %arg1: i32, %arg2: memref<2x32x256xf32, #tpu.memory_space<vmem>>, %arg3: memref<32x2xf32, #tpu.memory_space<vmem>>, %arg4: memref<1x2xf32, #tpu.memory_space<vmem>>, %arg5: memref<2x32xf32, #tpu.memory_space<vmem>>, %arg6: memref<1x32xf32, #tpu.memory_space<vmem>>, %arg7: memref<2x32xf32, #tpu.memory_space<vmem>>, %arg8: memref<2x32xf32, #tpu.memory_space<vmem>>, %arg9: memref<2x32xf32, #tpu.memory_space<vmem>>) attributes {dimension_semantics = [#tpu.dimension_semantics<parallel>, #tpu.dimension_semantics<arbitrary>], iteration_bounds = array<i64: 1, 1>, scalar_prefetch = 0 : i64, scratch_operands = 2 : i64, tpu.core_type = #tpu.core_type<tc>, window_params = [{transform_indices = @transform_0, window_bounds = array<i64: 2, 32, 256>}, {pipeline_mode = #tpu.pipeline_mode<synchronous>, transform_indices = @transform_1, window_bounds = array<i64: 32, 2>}, {pipeline_mode = #tpu.pipeline_mode<synchronous>, transform_indices = @transform_2, window_bounds = array<i64: 1, 2>}, {pipeline_mode = #tpu.pipeline_mode<synchronous>, transform_indices = @transform_3, window_bounds = array<i64: 2, 32>}, {pipeline_mode = #tpu.pipeline_mode<synchronous>, transform_indices = @transform_4, window_bounds = array<i64: 1, 32>}, {transform_indices = @transform_5, window_bounds = array<i64: 2, 32>}]} {
    %c0_i32 = arith.constant 0 : i32
    %0 = arith.cmpi eq, %arg1, %c0_i32 : i32
    %1 = arith.extui %0 : i1 to i32
    %c0_i32_0 = arith.constant 0 : i32
    %2 = arith.cmpi ne, %1, %c0_i32_0 : i32
    scf.if %2 {
      %cst_14 = arith.constant 0.000000e+00 : f32
      %15 = vector.broadcast %cst_14 : f32 to vector<2x32xf32>
      %c0_15 = arith.constant 0 : index
      %c0_16 = arith.constant 0 : index
      %16 = vector.load %arg8[%c0_15, %c0_16] : memref<2x32xf32, #tpu.memory_space<vmem>>, vector<2x32xf32>
      tpu.vector_store %arg8[%c0_15, %c0_16], %15 {strides = array<i32>} : memref<2x32xf32, #tpu.memory_space<vmem>>, vector<2x32xf32>,
      %cst_17 = arith.constant 0xFF800000 : f32
      %17 = vector.broadcast %cst_17 : f32 to vector<2x32xf32>
      %c0_18 = arith.constant 0 : index
      %c0_19 = arith.constant 0 : index
      %18 = vector.load %arg9[%c0_18, %c0_19] : memref<2x32xf32, #tpu.memory_space<vmem>>, vector<2x32xf32>
      tpu.vector_store %arg9[%c0_18, %c0_19], %17 {strides = array<i32>} : memref<2x32xf32, #tpu.memory_space<vmem>>, vector<2x32xf32>,
    } else {
    }
    %c0 = arith.constant 0 : index
    %c0_1 = arith.constant 0 : index
    %c0_2 = arith.constant 0 : index
    %3 = vector.load %arg2[%c0, %c0_1, %c0_2] : memref<2x32x256xf32, #tpu.memory_space<vmem>>, vector<2x32x256xf32>
    %cst = arith.constant dense<0.000000e+00> : vector<2x32xf32>
    %4 = vector.multi_reduction <add>, %3, %cst [2] : vector<2x32x256xf32> to vector<2x32xf32>
    %cst_3 = arith.constant dense<0xFF800000> : vector<2x32xf32>
    %5 = vector.multi_reduction <maximumf>, %3, %cst_3 [2] : vector<2x32x256xf32> to vector<2x32xf32>
    %c0_4 = arith.constant 0 : index
    %c0_5 = arith.constant 0 : index
    %6 = vector.load %arg8[%c0_4, %c0_5] : memref<2x32xf32, #tpu.memory_space<vmem>>, vector<2x32xf32>
    %7 = arith.addf %6, %4 : vector<2x32xf32>
    %c0_6 = arith.constant 0 : index
    %c0_7 = arith.constant 0 : index
    %8 = vector.load %arg8[%c0_6, %c0_7] : memref<2x32xf32, #tpu.memory_space<vmem>>, vector<2x32xf32>
    tpu.vector_store %arg8[%c0_6, %c0_7], %7 {strides = array<i32>} : memref<2x32xf32, #tpu.memory_space<vmem>>, vector<2x32xf32>,
    %c0_8 = arith.constant 0 : index
    %c0_9 = arith.constant 0 : index
    %9 = vector.load %arg9[%c0_8, %c0_9] : memref<2x32xf32, #tpu.memory_space<vmem>>, vector<2x32xf32>
    %10 = arith.maximumf %9, %5 : vector<2x32xf32>
    %c0_10 = arith.constant 0 : index
    %c0_11 = arith.constant 0 : index
    %11 = vector.load %arg9[%c0_10, %c0_11] : memref<2x32xf32, #tpu.memory_space<vmem>>, vector<2x32xf32>
    tpu.vector_store %arg9[%c0_10, %c0_11], %10 {strides = array<i32>} : memref<2x32xf32, #tpu.memory_space<vmem>>, vector<2x32xf32>,
    %c0_i32_12 = arith.constant 0 : i32
    %12 = arith.cmpi eq, %arg1, %c0_i32_12 : i32
    %13 = arith.extui %12 : i1 to i32
    %c0_i32_13 = arith.constant 0 : i32
    %14 = arith.cmpi ne, %13, %c0_i32_13 : i32
    scf.if %14 {
      %c0_14 = arith.constant 0 : index
      %c0_15 = arith.constant 0 : index
      %15 = vector.load %arg8[%c0_14, %c0_15] : memref<2x32xf32, #tpu.memory_space<vmem>>, vector<2x32xf32>
      %cst_16 = arith.constant 3.906250e-03 : f32
      %16 = vector.broadcast %cst_16 : f32 to vector<2x32xf32>
      %17 = arith.mulf %15, %16 : vector<2x32xf32>
      %c0_17 = arith.constant 0 : index
      %c0_18 = arith.constant 0 : index
      %18 = vector.load %arg9[%c0_17, %c0_18] : memref<2x32xf32, #tpu.memory_space<vmem>>, vector<2x32xf32>
      %19 = tpu.concatenate %17, %18 in 0 : vector<2x32xf32>, vector<2x32xf32> -> vector<4x32xf32>
      %c0_19 = arith.constant 0 : index
      %c0_20 = arith.constant 0 : index
      %20 = vector.load %arg3[%c0_19, %c0_20] : memref<32x2xf32, #tpu.memory_space<vmem>>, vector<32x2xf32>
      %c0_21 = arith.constant 0 : index
      %c0_22 = arith.constant 0 : index
      %21 = vector.load %arg4[%c0_21, %c0_22] : memref<1x2xf32, #tpu.memory_space<vmem>>, vector<1x2xf32>
      %c0_23 = arith.constant 0 : index
      %c0_24 = arith.constant 0 : index
      %22 = vector.load %arg5[%c0_23, %c0_24] : memref<2x32xf32, #tpu.memory_space<vmem>>, vector<2x32xf32>
      %c0_25 = arith.constant 0 : index
      %c0_26 = arith.constant 0 : index
      %23 = vector.load %arg6[%c0_25, %c0_26] : memref<1x32xf32, #tpu.memory_space<vmem>>, vector<1x32xf32>
      %cst_27 = arith.constant dense<0.000000e+00> : vector<4x2xf32>
      %24 = tpu.matmul %19, %20, %cst_27 {dimension_numbers = #tpu.dot_dimension_numbers<[1], [0], [0], [1], [0, 0, 1, 1], [], []>} : vector<4x32xf32>, vector<32x2xf32>, vector<4x2xf32> -> vector<4x2xf32>
      %25 = vector.broadcast %21 : vector<1x2xf32> to vector<4x2xf32>
      %26 = arith.addf %24, %25 : vector<4x2xf32>
      %cst_28 = arith.constant 0.000000e+00 : f32
      %27 = vector.broadcast %cst_28 : f32 to vector<4x2xf32>
      %28 = arith.maximumf %26, %27 : vector<4x2xf32>
      %cst_29 = arith.constant dense<0.000000e+00> : vector<4x32xf32>
      %29 = tpu.matmul %28, %22, %cst_29 {dimension_numbers = #tpu.dot_dimension_numbers<[1], [0], [0], [1], [0, 0, 1, 1], [], []>} : vector<4x2xf32>, vector<2x32xf32>, vector<4x32xf32> -> vector<4x32xf32>
      %30 = vector.broadcast %23 : vector<1x32xf32> to vector<4x32xf32>
      %31 = arith.addf %29, %30 : vector<4x32xf32>
      %32 = vector.extract_strided_slice %31 {offsets = [0, 0], sizes = [2, 32], strides = [1, 1]} : vector<4x32xf32> to vector<2x32xf32>
      %33 = vector.extract_strided_slice %31 {offsets = [2, 0], sizes = [2, 32], strides = [1, 1]} : vector<4x32xf32> to vector<2x32xf32>
      %34 = arith.addf %32, %33 : vector<2x32xf32>
      %35 = arith.negf %34 : vector<2x32xf32>
      %36 = math.exp %35 : vector<2x32xf32>
      %cst_30 = arith.constant 1.000000e+00 : f32
      %37 = vector.broadcast %cst_30 : f32 to vector<2x32xf32>
      %38 = arith.addf %37, %36 : vector<2x32xf32>
      %39 = arith.divf %37, %38 : vector<2x32xf32>
      %c0_31 = arith.constant 0 : index
      %c0_32 = arith.constant 0 : index
      %40 = vector.load %arg7[%c0_31, %c0_32] : memref<2x32xf32, #tpu.memory_space<vmem>>, vector<2x32xf32>
      tpu.vector_store %arg7[%c0_31, %c0_32], %39 {strides = array<i32>} : memref<2x32xf32, #tpu.memory_space<vmem>>, vector<2x32xf32>,
    } else {
    }
    return
  }
  func.func @transform_0(%arg0: i32, %arg1: i32) -> (i32, i32, i32) {
    %c0_i32 = arith.constant 0 : i32
    %c0_i32_0 = arith.constant 0 : i32
    return %arg0, %c0_i32, %arg1 : i32, i32, i32
  }
  func.func @transform_1(%arg0: i32, %arg1: i32) -> (i32, i32) {
    %c0_i32 = arith.constant 0 : i32
    %c0_i32_0 = arith.constant 0 : i32
    %c0_i32_1 = arith.constant 0 : i32
    return %c0_i32, %c0_i32_0 : i32, i32
  }
  func.func @transform_2(%arg0: i32, %arg1: i32) -> (i32, i32) {
    %c0_i32 = arith.constant 0 : i32
    %c0_i32_0 = arith.constant 0 : i32
    %c0_i32_1 = arith.constant 0 : i32
    return %c0_i32, %c0_i32_0 : i32, i32
  }
  func.func @transform_3(%arg0: i32, %arg1: i32) -> (i32, i32) {
    %c0_i32 = arith.constant 0 : i32
    %c0_i32_0 = arith.constant 0 : i32
    %c0_i32_1 = arith.constant 0 : i32
    return %c0_i32, %c0_i32_0 : i32, i32
  }
  func.func @transform_4(%arg0: i32, %arg1: i32) -> (i32, i32) {
    %c0_i32 = arith.constant 0 : i32
    %c0_i32_0 = arith.constant 0 : i32
    %c0_i32_1 = arith.constant 0 : i32
    return %c0_i32, %c0_i32_0 : i32, i32
  }
  func.func @transform_5(%arg0: i32, %arg1: i32) -> (i32, i32) {
    %c0_i32 = arith.constant 0 : i32
    %c0_i32_0 = arith.constant 0 : i32
    return %arg0, %c0_i32 : i32, i32
  }
}

</mosaic_0001>

<llo_original>
// kernel: tpu_custom_call.1
$region0: #{tpu_custom_call.1}
  #allocation0 [shape = 'u32[]', space=smem, size = 0x4, offset = 0x4, fixed_abs, tag = 'smem constant byte address 0x4 - core index']
  #allocation1 [shape = 'u32[144,128]{1,0:T(1,128)}', space=vmem, size = 0x12000, scoped, tag = 'internal scratch']
  #allocation2 [shape = 'f32[2,32]{1,0:T(2,128)}', space=vmem, size = 0x400, scoped, tag = 'scratch operand']
  #allocation3 [shape = 'f32[2,32]{1,0:T(2,128)}', space=vmem, size = 0x400, scoped, tag = 'scratch operand']
  %s0 = inlined_call_operand.hbm [shape: f32[2,32,256], index: 0, kind: input, shape index: {}]
  %s1 = inlined_call_operand.vmem [shape: f32[32,2], index: 1, kind: input, shape index: {}]
  %s2 = inlined_call_operand.vmem [shape: f32[1,2], index: 2, kind: input, shape index: {}]
  %s3 = inlined_call_operand.vmem [shape: f32[2,32], index: 3, kind: input, shape index: {}]
  %s4 = inlined_call_operand.vmem [shape: f32[1,32], index: 4, kind: input, shape index: {}]
  %s5 = inlined_call_operand.hbm [shape: f32[2,32], index: 5, kind: output, shape index: {}]
  %s6 = sld [smem:[#allocation0]]
  $region42: #{tpu_custom_call.1} parent=0
    _
  %s8 = ssub.s32 1, %s6
  %s9 = scalar_select 0, %s8, %s6
  $region1: #{tpu_custom_call.1} parent=0
    #allocation4 [shape = 'u8[65536]{0}', space=vmem, size = 0x10000, scoped, tag = 'input window, operand 0, single buffered']
    #allocation5 [shape = 's32[1]{0}', space=sflag, size = 0x4, scoped, tag = 'scoped memory for tpu_custom_call.1']
    #allocation6 [shape = 's32[1]{0}', space=sflag, size = 0x4, scoped, tag = 'scoped memory for tpu_custom_call.1']
    #allocation7 [shape = 'u8[1024]{0}', space=vmem, size = 0x400, scoped, tag = 'output window, operand 0, single buffered']
    %10 = vsyncpa [#allocation5], 0
    %11 = vsyncpa [#allocation6], 0
    // Predicated region
    $region2: #{tpu_custom_call.1} parent=1 // pred_check
      _
    $region3: #{tpu_custom_call.1} parent=1 // pred_check_branch
      %13 = sbr.rel (0) target = $region5
    $region4: #{tpu_custom_call.1} parent=1 // pred_region
      %s15 = ssub.s32 2048, 2048
      %16 = vsyncadd [#allocation5], %s15
      %s17 = sshll.u32 [#allocation4], 4
      %s18 = int_to_ptr.vmem [resolvable:$true] %s17
      %23 = dma.hbm_to_vmem [thread:$0]  %s0, 2048, %s18, [#allocation5], 256, 256, 16
    $region5: #{tpu_custom_call.1} parent=1 // pred_fallthru
      _
    // Predicated region
    $region6: #{tpu_custom_call.1} parent=1 // pred_check
      _
    $region7: #{tpu_custom_call.1} parent=1 // pred_check_branch
      %25 = sbr.rel (0) target = $region9
    $region8: #{tpu_custom_call.1} parent=1 // pred_region
      _
    $region9: #{tpu_custom_call.1} parent=1 // pred_fallthru
      _
    // Predicated region
    $region10: #{tpu_custom_call.1} parent=1 // pred_check
      _
    $region11: #{tpu_custom_call.1} parent=1 // pred_check_branch
      %27 = sbr.rel (0) target = $region13
    $region12: #{tpu_custom_call.1} parent=1 // pred_region
      _
    $region13: #{tpu_custom_call.1} parent=1 // pred_fallthru
      _
    // Predicated region
    $region14: #{tpu_custom_call.1} parent=1 // pred_check
      _
    $region15: #{tpu_custom_call.1} parent=1 // pred_check_branch
      %29 = sbr.rel (0) target = $region17
    $region16: #{tpu_custom_call.1} parent=1 // pred_region
      _
    $region17: #{tpu_custom_call.1} parent=1 // pred_fallthru
      _
    // Predicated region
    $region18: #{tpu_custom_call.1} parent=1 // pred_check
      _
    $region19: #{tpu_custom_call.1} parent=1 // pred_check_branch
      %31 = sbr.rel (0) target = $region21
    $region20: #{tpu_custom_call.1} parent=1 // pred_region
      _
    $region21: #{tpu_custom_call.1} parent=1 // pred_fallthru
      _
    // Predicated region
    $region22: #{tpu_custom_call.1} parent=1 // pred_check
      _
    $region23: #{tpu_custom_call.1} parent=1 // pred_check_branch
      %33 = sbr.rel (0) target = $region25
    $region24: #{tpu_custom_call.1} parent=1 // pred_region
      %34 = dma.done [#allocation5], 2048
    $region25: #{tpu_custom_call.1} parent=1 // pred_fallthru
      _
    %p35 = scmp.eq.s32.totalorder 0, 0
    // Predicated region
    $region26: #{tpu_custom_call.1} parent=1 // pred_check
      %p36 = pneg %p35
    $region27: #{tpu_custom_call.1} parent=1 // pred_check_branch
      %38 = sbr.rel (%p36) target = $region29
    $region28: #{tpu_custom_call.1} parent=1 // pred_region
      %vm39 = vcmask 254976
      %40 = vst.msk [vmem:[#allocation2] sm:$0x3] %vm39, 0.0
      %41 = vst.msk [vmem:[#allocation3] sm:$0x3] %vm39, -inf
    $region29: #{tpu_custom_call.1} parent=1 // pred_fallthru
      _
    %v42 = vld [vmem:[#allocation4] sm:$0xff]
    %v43 = vld [vmem:[#allocation4 + $0x8] sm:$0xff]
    %v44 = vld [vmem:[#allocation4 + $0x10] sm:$0xff]
    %v45 = vld [vmem:[#allocation4 + $0x18] sm:$0xff]
    %v46 = vld [vmem:[#allocation4 + $0x20] sm:$0xff]
    %v47 = vld [vmem:[#allocation4 + $0x28] sm:$0xff]
    %v48 = vld [vmem:[#allocation4 + $0x30] sm:$0xff]
    %v49 = vld [vmem:[#allocation4 + $0x38] sm:$0xff]
    %v50 = vld [vmem:[#allocation4 + $0x40] sm:$0xff]
    %v51 = vld [vmem:[#allocation4 + $0x48] sm:$0xff]
    %v52 = vld [vmem:[#allocation4 + $0x50] sm:$0xff]
    %v53 = vld [vmem:[#allocation4 + $0x58] sm:$0xff]
    %v54 = vld [vmem:[#allocation4 + $0x60] sm:$0xff]
    %v55 = vld [vmem:[#allocation4 + $0x68] sm:$0xff]
    %v56 = vld [vmem:[#allocation4 + $0x70] sm:$0xff]
    %v57 = vld [vmem:[#allocation4 + $0x78] sm:$0xff]
    %v58 = vadd.f32 %v42, %v43
    %59 = vadd.xlane.f32.xlu0 %v58
    %v60 = vpop.xlane.xlu0 %59
    %v61 = vadd.f32 %v44, %v45
    %62 = vadd.xlane.f32.xlu0 %v61
    %v63 = vpop.xlane.xlu0 %62
    %v64 = vadd.f32 %v46, %v47
    %65 = vadd.xlane.f32.xlu0 %v64
    %v66 = vpop.xlane.xlu0 %65
    %v67 = vadd.f32 %v48, %v49
    %68 = vadd.xlane.f32.xlu0 %v67
    %v69 = vpop.xlane.xlu0 %68
    %v70 = vadd.f32 %v50, %v51
    %71 = vadd.xlane.f32.xlu0 %v70
    %v72 = vpop.xlane.xlu0 %71
    %v73 = vadd.f32 %v52, %v53
    %74 = vadd.xlane.f32.xlu0 %v73
    %v75 = vpop.xlane.xlu0 %74
    %v76 = vadd.f32 %v54, %v55
    %77 = vadd.xlane.f32.xlu0 %v76
    %v78 = vpop.xlane.xlu0 %77
    %v79 = vadd.f32 %v56, %v57
    %80 = vadd.xlane.f32.xlu0 %v79
    %v81 = vpop.xlane.xlu0 %80
    %v82 = vmax.f32 %v42, %v43
    %83 = vmax.xlane.f32.xlu0 %v82
    %v84 = vpop.xlane.xlu0 %83
    %v85 = vmax.f32 %v44, %v45
    %86 = vmax.xlane.f32.xlu0 %v85
    %v87 = vpop.xlane.xlu0 %86
    %v88 = vmax.f32 %v46, %v47
    %89 = vmax.xlane.f32.xlu0 %v88
    %v90 = vpop.xlane.xlu0 %89
    %v91 = vmax.f32 %v48, %v49
    %92 = vmax.xlane.f32.xlu0 %v91
    %v93 = vpop.xlane.xlu0 %92
    %v94 = vmax.f32 %v50, %v51
    %95 = vmax.xlane.f32.xlu0 %v94
    %v96 = vpop.xlane.xlu0 %95
    %v97 = vmax.f32 %v52, %v53
    %98 = vmax.xlane.f32.xlu0 %v97
    %v99 = vpop.xlane.xlu0 %98
    %v100 = vmax.f32 %v54, %v55
    %101 = vmax.xlane.f32.xlu0 %v100
    %v102 = vpop.xlane.xlu0 %101
    %v103 = vmax.f32 %v56, %v57
    %104 = vmax.xlane.f32.xlu0 %v103
    %v105 = vpop.xlane.xlu0 %104
    %v106 = vld [vmem:[#allocation2] sm:$0x3]
    %v115 = vlaneseq
    %v116 = vand.u32 %v115, 127
    %v117 = vlaneseq
    %v118 = vshrl.u32 %v117, 7
    %v119 = vsub.s32 %v116, %v118
    %v120 = vrot.slane %v60, %v119
    %v121 = vadd.s32 %v116, 4294967288
    %v122 = vlaneseq
    %v123 = vshrl.u32 %v122, 7
    %v124 = vsub.s32 %v121, %v123
    %v125 = vrot.slane %v63, %v124
    %vm126 = vcmask 130112
    %v127 = vsel %vm126, %v125, %v120
    %v128 = vadd.s32 %v116, 4294967280
    %v129 = vlaneseq
    %v130 = vshrl.u32 %v129, 7
    %v131 = vsub.s32 %v128, %v130
    %v132 = vrot.slane %v66, %v131
    %vm133 = vcmask 195712
    %v134 = vsel %vm133, %v132, %v127
    %v135 = vadd.s32 %v116, 4294967272
    %v136 = vlaneseq
    %v137 = vshrl.u32 %v136, 7
    %v138 = vsub.s32 %v135, %v137
    %v139 = vrot.slane %v69, %v138
    %vm140 = vcmask 261312
    %v141 = vsel %vm140, %v139, %v134
    %v142 = vlaneseq
    %v143 = vshrl.u32 %v142, 7
    %v144 = vsub.s32 %v116, %v143
    %v145 = vrot.slane %v72, %v144
    %v146 = vlaneseq
    %v147 = vshrl.u32 %v146, 7
    %v148 = vsub.s32 %v121, %v147
    %v149 = vrot.slane %v75, %v148
    %v150 = vsel %vm126, %v149, %v145
    %v151 = vlaneseq
    %v152 = vshrl.u32 %v151, 7
    %v153 = vsub.s32 %v128, %v152
    %v154 = vrot.slane %v78, %v153
    %v155 = vsel %vm133, %v154, %v150
    %v156 = vlaneseq
    %v157 = vshrl.u32 %v156, 7
    %v158 = vsub.s32 %v135, %v157
    %v159 = vrot.slane %v81, %v158
    %v160 = vsel %vm140, %v159, %v155
    %vm161 = vcmask 1041409
    %v162 = vsel %vm161, %v160, %v141
    %v164 = vadd.f32 %v106, %v162
    %vm165 = vcmask 254976
    %166 = vst.msk [vmem:[#allocation2] sm:$0x3] %vm165, %v164
    %v167 = vld [vmem:[#allocation3] sm:$0x3]
    %v176 = vlaneseq
    %v177 = vshrl.u32 %v176, 7
    %v178 = vsub.s32 %v116, %v177
    %v179 = vrot.slane %v84, %v178
    %v180 = vlaneseq
    %v181 = vshrl.u32 %v180, 7
    %v182 = vsub.s32 %v121, %v181
    %v183 = vrot.slane %v87, %v182
    %v184 = vsel %vm126, %v183, %v179
    %v185 = vlaneseq
    %v186 = vshrl.u32 %v185, 7
    %v187 = vsub.s32 %v128, %v186
    %v188 = vrot.slane %v90, %v187
    %v189 = vsel %vm133, %v188, %v184
    %v190 = vlaneseq
    %v191 = vshrl.u32 %v190, 7
    %v192 = vsub.s32 %v135, %v191
    %v193 = vrot.slane %v93, %v192
    %v194 = vsel %vm140, %v193, %v189
    %v195 = vlaneseq
    %v196 = vshrl.u32 %v195, 7
    %v197 = vsub.s32 %v116, %v196
    %v198 = vrot.slane %v96, %v197
    %v199 = vlaneseq
    %v200 = vshrl.u32 %v199, 7
    %v201 = vsub.s32 %v121, %v200
    %v202 = vrot.slane %v99, %v201
    %v203 = vsel %vm126, %v202, %v198
    %v204 = vlaneseq
    %v205 = vshrl.u32 %v204, 7
    %v206 = vsub.s32 %v128, %v205
    %v207 = vrot.slane %v102, %v206
    %v208 = vsel %vm133, %v207, %v203
    %v209 = vlaneseq
    %v210 = vshrl.u32 %v209, 7
    %v211 = vsub.s32 %v135, %v210
    %v212 = vrot.slane %v105, %v211
    %v213 = vsel %vm140, %v212, %v208
    %v214 = vsel %vm161, %v213, %v194
    %v216 = vmax.f32 %v167, %v214
    %217 = vst.msk [vmem:[#allocation3] sm:$0x3] %vm165, %v216
    // Predicated region
    $region30: #{tpu_custom_call.1} parent=1 // pred_check
      %p218 = pneg %p35
    $region31: #{tpu_custom_call.1} parent=1 // pred_check_branch
      %220 = sbr.rel (%p218) target = $region33
    $region32: #{tpu_custom_call.1} parent=1 // pred_region
      %v221 = vld [vmem:[#allocation2] sm:$0x3]
      %v222 = vmul.f32 %v221, 0.00390625
      %v223 = vld [vmem:[#allocation3] sm:$0x3]
      %v225 = vrot.slane %v223, 6
      %vm227 = vcmask 1041408
      %v228 = vsel %vm227, %v222, %v225
      %v229 = vld [vmem:[%s1] sm:$0xff]
      %v230 = vld [vmem:[%s1 + $0x8] sm:$0xff]
      %v231 = vld [vmem:[%s1 + $0x10] sm:$0xff]
      %v232 = vld [vmem:[%s1 + $0x18] sm:$0xff]
      %v233 = vld [vmem:[%s2] sm:$0x1]
      %v234 = vld [vmem:[%s3] sm:$0x3]
      %v235 = vld [vmem:[%s4] sm:$0x1]
      %v237 = vlaneseq
      %v238 = vshrl.u32 %v237, 7
      %v239 = vsub.s32 0, %v238
      %v240 = vrot.slane %v233, %v239
      %vm242 = vcmask 261120
      %v244 = vsel %vm242, %v228, 0
      %246 = vmatprep.subr.mxu0 0.0
      %247 = vmatpush1.msra.mxu0 0.0
      %248 = vmatprep.subr.mxu0 0.0
      %249 = vmatpush1.msra.mxu0 0.0
      %250 = vmatprep.subr.mxu0 0.0
      %251 = vmatpush1.msra.mxu0 0.0
      %252 = vmatprep.subr.mxu0 0.0
      %253 = vmatpush1.msra.mxu0 0.0
      %254 = vmatprep.subr.mxu0 0.0
      %255 = vmatpush1.msra.mxu0 0.0
      %256 = vmatprep.subr.mxu0 0.0
      %257 = vmatpush1.msra.mxu0 0.0
      %258 = vmatprep.subr.mxu0 0.0
      %259 = vmatpush1.msra.mxu0 0.0
      %260 = vmatprep.subr.mxu0 0.0
      %261 = vmatpush1.msra.mxu0 0.0
      %262 = vmatprep.subr.mxu0 0.0
      %263 = vmatpush1.msra.mxu0 0.0
      %264 = vmatprep.subr.mxu0 0.0
      %265 = vmatpush1.msra.mxu0 0.0
      %266 = vmatprep.subr.mxu0 0.0
      %267 = vmatpush1.msra.mxu0 0.0
      %268 = vmatprep.subr.mxu0 0.0
      %269 = vmatpush1.msra.mxu0 0.0
      %270 = vmatprep.subr.mxu0 0.0
      %271 = vmatpush1.msra.mxu0 %v232
      %272 = vmatprep.subr.mxu0 0.0
      %273 = vmatpush1.msra.mxu0 %v231
      %274 = vmatprep.subr.mxu0 0.0
      %275 = vmatpush1.msra.mxu0 %v230
      %276 = vmatprep.subr.mxu0 0.0
      %277 = vmatpush1.msra.mxu0 %v229
      %278 = vmatprep.subr.mxu0 0.0
      %279 = vmatpush2.msra.mxu0 0.0
      %280 = vmatprep.subr.mxu0 0.0
      %281 = vmatpush2.msra.mxu0 0.0
      %282 = vmatprep.subr.mxu0 0.0
      %283 = vmatpush2.msra.mxu0 0.0
      %284 = vmatprep.subr.mxu0 0.0
      %285 = vmatpush2.msra.mxu0 0.0
      %286 = vmatprep.subr.mxu0 0.0
      %287 = vmatpush2.msra.mxu0 0.0
      %288 = vmatprep.subr.mxu0 0.0
      %289 = vmatpush2.msra.mxu0 0.0
      %290 = vmatprep.subr.mxu0 0.0
      %291 = vmatpush2.msra.mxu0 0.0
      %292 = vmatprep.subr.mxu0 0.0
      %293 = vmatpush2.msra.mxu0 0.0
      %294 = vmatprep.subr.mxu0 0.0
      %295 = vmatpush2.msra.mxu0 0.0
      %296 = vmatprep.subr.mxu0 0.0
      %297 = vmatpush2.msra.mxu0 0.0
      %298 = vmatprep.subr.mxu0 0.0
      %299 = vmatpush2.msra.mxu0 0.0
      %300 = vmatprep.subr.mxu0 0.0
      %301 = vmatpush2.msra.mxu0 0.0
      %302 = vmatprep.subr.mxu0 0.0
      %303 = vmatpush2.msra.mxu0 0.0
      %304 = vmatprep.subr.mxu0 0.0
      %305 = vmatpush2.msra.mxu0 0.0
      %306 = vmatprep.subr.mxu0 0.0
      %307 = vmatpush2.msra.mxu0 0.0
      %308 = vmatprep.subr.mxu0 0.0
      %309 = vmatpush2.msra.mxu0 0.0
      %310 = vmatprep.mubr.f32.mxu0 0.0
      %311 = vmatmul.mubr.f32.gmra.mxu0 %v244
      %v312 = vpop.f32.mrf.mxu0
      %v313 = vadd.f32 %v240, %v312
      %v314 = vpop.f32.mrf.mxu0
      %315 = vdwg.mxu0
      %v316 = vmax.f32 %v313, 0.0
      %v318 = vlaneseq
      %v319 = vshrl.u32 %v318, 7
      %v320 = vsub.s32 0, %v319
      %v321 = vrot.slane %v235, %v320
      %vm323 = vcmask 15360
      %v325 = vsel %vm323, %v316, 0
      %v328 = vsel %vm227, %v234, 0
      %330 = vmatprep.subr.mxu0 0.0
      %331 = vmatpush1.msra.mxu0 0.0
      %332 = vmatprep.subr.mxu0 0.0
      %333 = vmatpush1.msra.mxu0 0.0
      %334 = vmatprep.subr.mxu0 0.0
      %335 = vmatpush1.msra.mxu0 0.0
      %336 = vmatprep.subr.mxu0 0.0
      %337 = vmatpush1.msra.mxu0 0.0
      %338 = vmatprep.subr.mxu0 0.0
      %339 = vmatpush1.msra.mxu0 0.0
      %340 = vmatprep.subr.mxu0 0.0
      %341 = vmatpush1.msra.mxu0 0.0
      %342 = vmatprep.subr.mxu0 0.0
      %343 = vmatpush1.msra.mxu0 0.0
      %344 = vmatprep.subr.mxu0 0.0
      %345 = vmatpush1.msra.mxu0 0.0
      %346 = vmatprep.subr.mxu0 0.0
      %347 = vmatpush1.msra.mxu0 0.0
      %348 = vmatprep.subr.mxu0 0.0
      %349 = vmatpush1.msra.mxu0 0.0
      %350 = vmatprep.subr.mxu0 0.0
      %351 = vmatpush1.msra.mxu0 0.0
      %352 = vmatprep.subr.mxu0 0.0
      %353 = vmatpush1.msra.mxu0 0.0
      %354 = vmatprep.subr.mxu0 0.0
      %355 = vmatpush1.msra.mxu0 0.0
      %356 = vmatprep.subr.mxu0 0.0
      %357 = vmatpush1.msra.mxu0 0.0
      %358 = vmatprep.subr.mxu0 0.0
      %359 = vmatpush1.msra.mxu0 0.0
      %360 = vmatprep.subr.mxu0 0.0
      %361 = vmatpush1.msra.mxu0 %v328
      %362 = vmatprep.subr.mxu0 0.0
      %363 = vmatpush2.msra.mxu0 0.0
      %364 = vmatprep.subr.mxu0 0.0
      %365 = vmatpush2.msra.mxu0 0.0
      %366 = vmatprep.subr.mxu0 0.0
      %367 = vmatpush2.msra.mxu0 0.0
      %368 = vmatprep.subr.mxu0 0.0
      %369 = vmatpush2.msra.mxu0 0.0
      %370 = vmatprep.subr.mxu0 0.0
      %371 = vmatpush2.msra.mxu0 0.0
      %372 = vmatprep.subr.mxu0 0.0
      %373 = vmatpush2.msra.mxu0 0.0
      %374 = vmatprep.subr.mxu0 0.0
      %375 = vmatpush2.msra.mxu0 0.0
      %376 = vmatprep.subr.mxu0 0.0
      %377 = vmatpush2.msra.mxu0 0.0
      %378 = vmatprep.subr.mxu0 0.0
      %379 = vmatpush2.msra.mxu0 0.0
      %380 = vmatprep.subr.mxu0 0.0
      %381 = vmatpush2.msra.mxu0 0.0
      %382 = vmatprep.subr.mxu0 0.0
      %383 = vmatpush2.msra.mxu0 0.0
      %384 = vmatprep.subr.mxu0 0.0
      %385 = vmatpush2.msra.mxu0 0.0
      %386 = vmatprep.subr.mxu0 0.0
      %387 = vmatpush2.msra.mxu0 0.0
      %388 = vmatprep.subr.mxu0 0.0
      %389 = vmatpush2.msra.mxu0 0.0
      %390 = vmatprep.subr.mxu0 0.0
      %391 = vmatpush2.msra.mxu0 0.0
      %392 = vmatprep.subr.mxu0 0.0
      %393 = vmatpush2.msra.mxu0 0.0
      %394 = vmatprep.mubr.f32.mxu0 0.0
      %395 = vmatmul.mubr.f32.gmra.mxu0 %v325
      %v396 = vpop.f32.mrf.mxu0
      %v397 = vadd.f32 %v321, %v396
      %v398 = vpop.f32.mrf.mxu0
      %399 = vdwg.mxu0
      %v401 = vrot.slane %v397, 2
      %v403 = vadd.f32 %v397, %v401
      %v404 = vxor.u32 %v403, 2147483648
      %v405 = vmul.f32 %v404, 1.442695
      %v406 = vpow.pop %v405
      %v407 = vadd.f32 %v406, 1.0
      %v408 = vrcp.pop %v407
      %v409 = vmul.f32 1.0, %v408
      %410 = vst.msk [vmem:[#allocation7] sm:$0x3] %vm165, %v409
    $region33: #{tpu_custom_call.1} parent=1 // pred_fallthru
      _
    // Predicated region
    $region34: #{tpu_custom_call.1} parent=1 // pred_check
      _
    $region35: #{tpu_custom_call.1} parent=1 // pred_check_branch
      %412 = sbr.rel (0) target = $region37
    $region36: #{tpu_custom_call.1} parent=1 // pred_region
      %s414 = ssub.s32 32, 32
      %415 = vsyncadd [#allocation6], %s414
      %s417 = sshll.u32 [#allocation7], 4
      %s418 = int_to_ptr.vmem [resolvable:$true] %s417
      %420 = dma.vmem_to_hbm [thread:$0]  %s418, 32, %s5, [#allocation6]
    $region37: #{tpu_custom_call.1} parent=1 // pred_fallthru
      _
    // Predicated region
    $region38: #{tpu_custom_call.1} parent=1 // pred_check
      _
    $region39: #{tpu_custom_call.1} parent=1 // pred_check_branch
      %422 = sbr.rel (0) target = $region41
    $region40: #{tpu_custom_call.1} parent=1 // pred_region
      %423 = dma.done [#allocation6], 32
    $region41: #{tpu_custom_call.1} parent=1 // pred_fallthru
      _
    %424 = vsyncpa [#allocation5], 1
    %425 = vsyncpa [#allocation6], 1

</llo_original>
